<compile_context>
chip_gen: v7x
topology: tpu7x:2x2x1
jax: 0.10.0
libtpu: 0.0.40
codegen_flags: <defaults>
</compile_context>

<pallas_src>
import jax
import jax.numpy as jnp
from jax.experimental import pallas as pl
from jax.experimental.pallas import tpu as pltpu

_LANE = 128


def _module_parallel_kernel_vpu(x_ref, w_ref, b_ref, o_ref):
    """Small-Cin path: unrolled VPU broadcast-multiply-add over Cin.

    x_ref: (Nb, Cin, S)   w_ref: (Ctot, Cin)   b_ref: (Ctot, 1)
    o_ref: (Nb, Ctot, S)
    """
    nb, cin, _ = x_ref.shape
    w = w_ref[...].astype(jnp.float32)                 # (Ctot, Cin)
    b = b_ref[...].astype(jnp.float32)                 # (Ctot, 1)
    # Hoist per-input-channel weight columns (lane broadcasts) out of the loops.
    w_cols = [w[:, c:c + 1] for c in range(cin)]       # each (Ctot, 1)
    for n in range(nb):                                # Nb is small and static
        x_n = x_ref[n].astype(jnp.float32)             # (Cin, S)
        acc = b + w_cols[0] * x_n[0:1, :]              # (Ctot, S)
        for c in range(1, cin):
            acc = acc + w_cols[c] * x_n[c:c + 1, :]
        o_ref[n] = acc.astype(o_ref.dtype)


def _module_parallel_kernel_mxu(x_ref, w_ref, b_ref, o_ref):
    """General path: MXU matmul per batch element in the block."""
    nb = x_ref.shape[0]
    w = w_ref[...]
    b = b_ref[...].astype(jnp.float32)
    for n in range(nb):
        acc = jnp.dot(w, x_ref[n], preferred_element_type=jnp.float32)
        o_ref[n] = (acc + b).astype(o_ref.dtype)


def fuse_branch_params(branch_weights, branch_biases):
    """Concatenate per-branch 1x1-conv params along the output-channel axis.

    Matches torch.cat([m(inp) for m in modules], dim=1) ordering.  Hoist this
    out of the per-call hot path (or let jit constant-fold it).
    """
    cin = branch_weights[0].shape[1]
    w_cat = jnp.concatenate(
        [w.reshape(w.shape[0], cin) for w in branch_weights], axis=0
    )  # (Ctot, Cin)
    b_cat = jnp.concatenate(branch_biases, axis=0).reshape(-1, 1)  # (Ctot, 1)
    return w_cat, b_cat


def module_parallel_forward(
    x_nchw,
    w_cat,
    b_cat,
    *,
    s_tile_max=32768,              # lanes per step; ~1-3 MB of output per step
    small_problem_bytes=2 << 20,   # below this, collapse to a single grid step
    vmem_budget_bytes=48 << 20,    # headroom under v7x's 64 MiB physical VMEM
    out_dtype=None,                # e.g. jnp.bfloat16 to cut output HBM bytes
):
    """ModuleParallel forward: fused 1x1-conv branches + channel concat.

    x_nchw: (N, Cin, H, W); w_cat: (Ctot, Cin); b_cat: (Ctot, 1)
    returns (N, Ctot, H, W) in out_dtype (defaults to x dtype).
    """
    N, Cin, H, W = x_nchw.shape
    hw = H * W
    Ctot = w_cat.shape[0]
    out_dtype = x_nchw.dtype if out_dtype is None else jnp.dtype(out_dtype)

    in_itemsize = jnp.dtype(x_nchw.dtype).itemsize
    out_itemsize = jnp.dtype(out_dtype).itemsize
    par_itemsize = jnp.dtype(w_cat.dtype).itemsize

    # NCHW -> (N, Cin, H*W): contiguous (free) reshape, no transpose.
    x3 = x_nchw.reshape(N, Cin, hw)

    # ---- spatial tile -------------------------------------------------------
    if hw <= s_tile_max:
        s_tile = hw                       # full spatial dim: always a valid block
    else:
        cap = (s_tile_max // _LANE) * _LANE
        s_tile = cap
        # Prefer a lane-multiple tile that divides hw (no masked tail), but do
        # not shrink below half the cap to find one.
        for cand in range(cap, max(_LANE, cap // 2) - 1, -_LANE):
            if hw % cand == 0:
                s_tile = cand
                break

    # ---- VMEM clamp (re-derive if Ctot grows) -------------------------------
    def _buf_bytes(nb_, st_):
        # double-buffered input block + output block
        return 2 * nb_ * st_ * (Cin * in_itemsize + Ctot * out_itemsize)

    while _buf_bytes(1, s_tile) > vmem_budget_bytes and s_tile > _LANE:
        s_tile = max(_LANE, ((s_tile // 2) // _LANE) * _LANE)

    n_s = pl.cdiv(hw, s_tile)

    # ---- batch folding: amortize launch/step overhead on tiny problems ------
    total_out_bytes = N * Ctot * hw * out_itemsize
    nb = 1
    if n_s == 1 and total_out_bytes <= small_problem_bytes:
        nb = N
        while N % nb != 0:
            nb -= 1
    n_b = N // nb

    # ---- v7x: keep >=2 grid steps when the problem is not tiny --------------
    if n_b * n_s == 1 and total_out_bytes > small_problem_bytes and hw >= 2 * _LANE:
        half = -(-hw // 2)
        s_tile = -(-half // _LANE) * _LANE
        n_s = pl.cdiv(hw, s_tile)

    # ---- cost / compiler params ----------------------------------------------
    flops = 2 * N * hw * Cin * Ctot
    bytes_accessed = (
        x3.size * in_itemsize
        + (w_cat.size + b_cat.size) * par_itemsize
        + N * Ctot * hw * out_itemsize
    )
    vmem_limit = int(
        min(
            100 << 20,
            max(
                16 << 20,
                _buf_bytes(nb, s_tile)
                + (w_cat.size + b_cat.size) * par_itemsize
                + (8 << 20),
            ),
        )
    )

    # K = Cin is tiny for these branches -> VPU FMA path; otherwise MXU.
    kernel = _module_parallel_kernel_vpu if Cin <= 8 else _module_parallel_kernel_mxu

    out3 = pl.pallas_call(
        kernel,
        out_shape=jax.ShapeDtypeStruct((N, Ctot, hw), out_dtype),
        grid=(n_b, n_s),
        in_specs=[
            pl.BlockSpec((nb, Cin, s_tile), lambda i, s: (i, 0, s)),
            pl.BlockSpec((Ctot, Cin), lambda i, s: (0, 0)),   # VMEM-resident
            pl.BlockSpec((Ctot, 1), lambda i, s: (0, 0)),     # VMEM-resident
        ],
        out_specs=pl.BlockSpec((nb, Ctot, s_tile), lambda i, s: (i, 0, s)),
        compiler_params=pltpu.CompilerParams(
            dimension_semantics=("parallel", "parallel"),
            vmem_limit_bytes=vmem_limit,
        ),
        cost_estimate=pl.CostEstimate(
            flops=int(flops), transcendentals=0, bytes_accessed=int(bytes_accessed)
        ),
    )(x3, w_cat, b_cat)

    # (N, Ctot, H*W) -> (N, Ctot, H, W): free contiguous reshape.
    return out3.reshape(N, Ctot, H, W)


def _reference(x, branch_weights, branch_biases):
    refs = []
    for wgt, bias in zip(branch_weights, branch_biases):
        w2d = wgt.reshape(wgt.shape[0], -1)  # (Cout, Cin)
        r = jnp.einsum("nchw,oc->nohw", x, w2d) + bias.reshape(1, -1, 1, 1)
        refs.append(r)
    return jnp.concatenate(refs, axis=1)


if __name__ == "__main__":
    key = jax.random.PRNGKey(0)

    # Small shapes: batch=2, Cin=4, spatial=16x16; 3 parallel 1x1-conv branches
    # each producing 8 output channels -> concatenated output has 24 channels.
    N, Cin, H, W = 2, 4, 16, 16
    branch_couts = [8, 8, 8]

    k_x, k_x2, *k_params = jax.random.split(key, 2 + 2 * len(branch_couts))
    x = jax.random.normal(k_x, (N, Cin, H, W), dtype=jnp.float32)

    branch_weights, branch_biases = [], []
    for i, cout in enumerate(branch_couts):
        kw, kb = k_params[2 * i], k_params[2 * i + 1]
        fan_in = Cin * 1 * 1                       # PyTorch conv default init range
        bound = 1.0 / (float(fan_in) ** 0.5)
        wgt = jax.random.uniform(
            kw, (cout, Cin, 1, 1), dtype=jnp.float32, minval=-bound, maxval=bound
        )
        bias = jax.random.uniform(
            kb, (cout,), dtype=jnp.float32, minval=-bound, maxval=bound
        )
        branch_weights.append(wgt)
        branch_biases.append(bias)

    # Fuse branch parameters once (hoisted out of the per-call path).
    w_cat, b_cat = fuse_branch_params(branch_weights, branch_biases)

    out = module_parallel_forward(x, w_cat, b_cat)
    out = jax.block_until_ready(out)

    ref = _reference(x, branch_weights, branch_biases)
    assert out.shape == (N, sum(branch_couts), H, W), out.shape
    assert jnp.allclose(out, ref, atol=1e-5, rtol=1e-5)

    # Extra sanity: spatial extent < 128 and batch not equal to 2
    # (exercises full-dim blocks with masked narrow stores + batch folding).
    x2 = jax.random.normal(k_x2, (3, Cin, 6, 6), dtype=jnp.float32)
    out2 = jax.block_until_ready(module_parallel_forward(x2, w_cat, b_cat))
    ref2 = _reference(x2, branch_weights, branch_biases)
    assert out2.shape == (3, sum(branch_couts), 6, 6), out2.shape
    assert jnp.allclose(out2, ref2, atol=1e-5, rtol=1e-5)

    print("KERNEL_OK")
</pallas_src>

<mosaic_0001>
module attributes {stable_mosaic.version = 11 : i64} {
  func.func @_module_parallel_kernel_vpu(%arg0: i32, %arg1: i32, %arg2: memref<2x4x256xf32, #tpu.memory_space<vmem>>, %arg3: memref<24x4xf32, #tpu.memory_space<vmem>>, %arg4: memref<24x1xf32, #tpu.memory_space<vmem>>, %arg5: memref<2x24x256xf32, #tpu.memory_space<vmem>>) attributes {dimension_semantics = [#tpu.dimension_semantics<parallel>, #tpu.dimension_semantics<parallel>], iteration_bounds = array<i64: 1, 1>, scalar_prefetch = 0 : i64, scratch_operands = 0 : i64, tpu.core_type = #tpu.core_type<tc>, window_params = [{transform_indices = @transform_0, window_bounds = array<i64: 2, 4, 256>}, {pipeline_mode = #tpu.pipeline_mode<synchronous>, transform_indices = @transform_1, window_bounds = array<i64: 24, 4>}, {pipeline_mode = #tpu.pipeline_mode<synchronous>, transform_indices = @transform_2, window_bounds = array<i64: 24, 1>}, {transform_indices = @transform_3, window_bounds = array<i64: 2, 24, 256>}]} {
    %c0 = arith.constant 0 : index
    %c0_0 = arith.constant 0 : index
    %0 = vector.load %arg3[%c0, %c0_0] : memref<24x4xf32, #tpu.memory_space<vmem>>, vector<24x4xf32>
    %c0_1 = arith.constant 0 : index
    %c0_2 = arith.constant 0 : index
    %1 = vector.load %arg4[%c0_1, %c0_2] : memref<24x1xf32, #tpu.memory_space<vmem>>, vector<24x1xf32>
    %2 = vector.extract_strided_slice %0 {offsets = [0, 0], sizes = [24, 1], strides = [1, 1]} : vector<24x4xf32> to vector<24x1xf32>
    %3 = vector.extract_strided_slice %0 {offsets = [0, 1], sizes = [24, 1], strides = [1, 1]} : vector<24x4xf32> to vector<24x1xf32>
    %4 = vector.extract_strided_slice %0 {offsets = [0, 2], sizes = [24, 1], strides = [1, 1]} : vector<24x4xf32> to vector<24x1xf32>
    %5 = vector.extract_strided_slice %0 {offsets = [0, 3], sizes = [24, 1], strides = [1, 1]} : vector<24x4xf32> to vector<24x1xf32>
    %c0_3 = arith.constant 0 : index
    %c0_4 = arith.constant 0 : index
    %c0_5 = arith.constant 0 : index
    %6 = vector.load %arg2[%c0_3, %c0_4, %c0_5] : memref<2x4x256xf32, #tpu.memory_space<vmem>>, vector<1x4x256xf32>
    %7 = vector.shape_cast %6 : vector<1x4x256xf32> to vector<4x256xf32>
    %8 = vector.extract_strided_slice %7 {offsets = [0, 0], sizes = [1, 256], strides = [1, 1]} : vector<4x256xf32> to vector<1x256xf32>
    %9 = vector.broadcast %2 : vector<24x1xf32> to vector<24x256xf32>
    %10 = vector.broadcast %8 : vector<1x256xf32> to vector<24x256xf32>
    %11 = arith.mulf %9, %10 : vector<24x256xf32>
    %12 = vector.broadcast %1 : vector<24x1xf32> to vector<24x256xf32>
    %13 = arith.addf %12, %11 : vector<24x256xf32>
    %14 = vector.extract_strided_slice %7 {offsets = [1, 0], sizes = [1, 256], strides = [1, 1]} : vector<4x256xf32> to vector<1x256xf32>
    %15 = vector.broadcast %3 : vector<24x1xf32> to vector<24x256xf32>
    %16 = vector.broadcast %14 : vector<1x256xf32> to vector<24x256xf32>
    %17 = arith.mulf %15, %16 : vector<24x256xf32>
    %18 = arith.addf %13, %17 : vector<24x256xf32>
    %19 = vector.extract_strided_slice %7 {offsets = [2, 0], sizes = [1, 256], strides = [1, 1]} : vector<4x256xf32> to vector<1x256xf32>
    %20 = vector.broadcast %4 : vector<24x1xf32> to vector<24x256xf32>
    %21 = vector.broadcast %19 : vector<1x256xf32> to vector<24x256xf32>
    %22 = arith.mulf %20, %21 : vector<24x256xf32>
    %23 = arith.addf %18, %22 : vector<24x256xf32>
    %24 = vector.extract_strided_slice %7 {offsets = [3, 0], sizes = [1, 256], strides = [1, 1]} : vector<4x256xf32> to vector<1x256xf32>
    %25 = vector.broadcast %5 : vector<24x1xf32> to vector<24x256xf32>
    %26 = vector.broadcast %24 : vector<1x256xf32> to vector<24x256xf32>
    %27 = arith.mulf %25, %26 : vector<24x256xf32>
    %28 = arith.addf %23, %27 : vector<24x256xf32>
    %c0_6 = arith.constant 0 : index
    %c0_7 = arith.constant 0 : index
    %c0_8 = arith.constant 0 : index
    %29 = vector.load %arg5[%c0_6, %c0_7, %c0_8] : memref<2x24x256xf32, #tpu.memory_space<vmem>>, vector<1x24x256xf32>
    %30 = vector.shape_cast %29 : vector<1x24x256xf32> to vector<24x256xf32>
    %31 = vector.shape_cast %28 : vector<24x256xf32> to vector<1x24x256xf32>
    tpu.vector_store %arg5[%c0_6, %c0_7, %c0_8], %31 {strides = array<i32>} : memref<2x24x256xf32, #tpu.memory_space<vmem>>, vector<1x24x256xf32>,
    %c1 = arith.constant 1 : index
    %c0_9 = arith.constant 0 : index
    %c0_10 = arith.constant 0 : index
    %32 = vector.load %arg2[%c1, %c0_9, %c0_10] : memref<2x4x256xf32, #tpu.memory_space<vmem>>, vector<1x4x256xf32>
    %33 = vector.shape_cast %32 : vector<1x4x256xf32> to vector<4x256xf32>
    %34 = vector.extract_strided_slice %33 {offsets = [0, 0], sizes = [1, 256], strides = [1, 1]} : vector<4x256xf32> to vector<1x256xf32>
    %35 = vector.broadcast %2 : vector<24x1xf32> to vector<24x256xf32>
    %36 = vector.broadcast %34 : vector<1x256xf32> to vector<24x256xf32>
    %37 = arith.mulf %35, %36 : vector<24x256xf32>
    %38 = vector.broadcast %1 : vector<24x1xf32> to vector<24x256xf32>
    %39 = arith.addf %38, %37 : vector<24x256xf32>
    %40 = vector.extract_strided_slice %33 {offsets = [1, 0], sizes = [1, 256], strides = [1, 1]} : vector<4x256xf32> to vector<1x256xf32>
    %41 = vector.broadcast %3 : vector<24x1xf32> to vector<24x256xf32>
    %42 = vector.broadcast %40 : vector<1x256xf32> to vector<24x256xf32>
    %43 = arith.mulf %41, %42 : vector<24x256xf32>
    %44 = arith.addf %39, %43 : vector<24x256xf32>
    %45 = vector.extract_strided_slice %33 {offsets = [2, 0], sizes = [1, 256], strides = [1, 1]} : vector<4x256xf32> to vector<1x256xf32>
    %46 = vector.broadcast %4 : vector<24x1xf32> to vector<24x256xf32>
    %47 = vector.broadcast %45 : vector<1x256xf32> to vector<24x256xf32>
    %48 = arith.mulf %46, %47 : vector<24x256xf32>
    %49 = arith.addf %44, %48 : vector<24x256xf32>
    %50 = vector.extract_strided_slice %33 {offsets = [3, 0], sizes = [1, 256], strides = [1, 1]} : vector<4x256xf32> to vector<1x256xf32>
    %51 = vector.broadcast %5 : vector<24x1xf32> to vector<24x256xf32>
    %52 = vector.broadcast %50 : vector<1x256xf32> to vector<24x256xf32>
    %53 = arith.mulf %51, %52 : vector<24x256xf32>
    %54 = arith.addf %49, %53 : vector<24x256xf32>
    %c1_11 = arith.constant 1 : index
    %c0_12 = arith.constant 0 : index
    %c0_13 = arith.constant 0 : index
    %55 = vector.load %arg5[%c1_11, %c0_12, %c0_13] : memref<2x24x256xf32, #tpu.memory_space<vmem>>, vector<1x24x256xf32>
    %56 = vector.shape_cast %55 : vector<1x24x256xf32> to vector<24x256xf32>
    %57 = vector.shape_cast %54 : vector<24x256xf32> to vector<1x24x256xf32>
    tpu.vector_store %arg5[%c1_11, %c0_12, %c0_13], %57 {strides = array<i32>} : memref<2x24x256xf32, #tpu.memory_space<vmem>>, vector<1x24x256xf32>,
    return
  }
  func.func @transform_0(%arg0: i32, %arg1: i32) -> (i32, i32, i32) {
    %c0_i32 = arith.constant 0 : i32
    %c0_i32_0 = arith.constant 0 : i32
    return %arg0, %c0_i32, %arg1 : i32, i32, i32
  }
  func.func @transform_1(%arg0: i32, %arg1: i32) -> (i32, i32) {
    %c0_i32 = arith.constant 0 : i32
    %c0_i32_0 = arith.constant 0 : i32
    %c0_i32_1 = arith.constant 0 : i32
    return %c0_i32, %c0_i32_0 : i32, i32
  }
  func.func @transform_2(%arg0: i32, %arg1: i32) -> (i32, i32) {
    %c0_i32 = arith.constant 0 : i32
    %c0_i32_0 = arith.constant 0 : i32
    %c0_i32_1 = arith.constant 0 : i32
    return %c0_i32, %c0_i32_0 : i32, i32
  }
  func.func @transform_3(%arg0: i32, %arg1: i32) -> (i32, i32, i32) {
    %c0_i32 = arith.constant 0 : i32
    %c0_i32_0 = arith.constant 0 : i32
    return %arg0, %c0_i32, %arg1 : i32, i32, i32
  }
}

</mosaic_0001>

<llo_original>
// kernel: tpu_custom_call.1
$region0: #{tpu_custom_call.1}
  #allocation0 [shape = 'u32[]', space=smem, size = 0x4, offset = 0x4, fixed_abs, tag = 'smem constant byte address 0x4 - core index']
  #allocation1 [shape = 'u32[144,128]{1,0:T(1,128)}', space=vmem, size = 0x12000, scoped, tag = 'internal scratch']
  %s0 = inlined_call_operand.vmem [shape: f32[2,4,256], index: 0, kind: input, shape index: {}]
  %s1 = inlined_call_operand.vmem [shape: f32[24,4], index: 1, kind: input, shape index: {}]
  %s2 = inlined_call_operand.vmem [shape: f32[24,1], index: 2, kind: input, shape index: {}]
  %s3 = inlined_call_operand.hbm [shape: f32[2,24,256], index: 3, kind: output, shape index: {}]
  %s4 = sld [smem:[#allocation0]]
  $region22: #{tpu_custom_call.1} parent=0
    _
  %s6 = ssub.s32 1, %s4
  %s7 = scalar_select 0, %s6, %s4
  $region1: #{tpu_custom_call.1} parent=0
    #allocation2 [shape = 'u8[49152]{0}', space=vmem, size = 0xc000, scoped, tag = 'output window, operand 0, single buffered']
    #allocation3 [shape = 's32[1]{0}', space=sflag, size = 0x4, scoped, tag = 'scoped memory for tpu_custom_call.1']
    %8 = vsyncpa [#allocation3], 0
    // Predicated region
    $region2: #{tpu_custom_call.1} parent=1 // pred_check
      _
    $region3: #{tpu_custom_call.1} parent=1 // pred_check_branch
      %10 = sbr.rel (0) target = $region5
    $region4: #{tpu_custom_call.1} parent=1 // pred_region
      _
    $region5: #{tpu_custom_call.1} parent=1 // pred_fallthru
      _
    // Predicated region
    $region6: #{tpu_custom_call.1} parent=1 // pred_check
      _
    $region7: #{tpu_custom_call.1} parent=1 // pred_check_branch
      %12 = sbr.rel (0) target = $region9
    $region8: #{tpu_custom_call.1} parent=1 // pred_region
      _
    $region9: #{tpu_custom_call.1} parent=1 // pred_fallthru
      _
    // Predicated region
    $region10: #{tpu_custom_call.1} parent=1 // pred_check
      _
    $region11: #{tpu_custom_call.1} parent=1 // pred_check_branch
      %14 = sbr.rel (0) target = $region13
    $region12: #{tpu_custom_call.1} parent=1 // pred_region
      _
    $region13: #{tpu_custom_call.1} parent=1 // pred_fallthru
      _
    %v15 = vld [vmem:[%s1] sm:$0xff]
    %v16 = vld [vmem:[%s1 + $0x8] sm:$0xff]
    %v17 = vld [vmem:[%s1 + $0x10] sm:$0xff]
    %v18 = vld [vmem:[%s2] sm:$0xff]
    %v19 = vld [vmem:[%s2 + $0x8] sm:$0xff]
    %v20 = vld [vmem:[%s2 + $0x10] sm:$0xff]
    %v21 = vld [vmem:[%s0] sm:$0xff]
    %23 = vset.pattern.permute.xlu0 0
    %24 = vperm.xlu0 %23, %v15
    %v25 = vpop.permute.xlu0 %24
    %28 = vset.pattern.permute.xlu0 0
    %29 = vperm.xlu0 %28, %v16
    %v30 = vpop.permute.xlu0 %29
    %33 = vset.pattern.permute.xlu0 0
    %34 = vperm.xlu0 %33, %v17
    %v35 = vpop.permute.xlu0 %34
    %v38 = vlaneseq
    %v39 = vshrl.u32 %v38, 7
    %v40 = vsub.s32 0, %v39
    %v41 = vrot.slane %v21, %v40
    %v42 = vlaneseq
    %v43 = vshrl.u32 %v42, 7
    %v44 = vsub.s32 4, %v43
    %v45 = vrot.slane %v21, %v44
    %v48 = vlaneseq
    %v49 = vshrl.u32 %v48, 7
    %v50 = vsub.s32 0, %v49
    %v51 = vrot.slane %v41, %v50
    %v52 = vlaneseq
    %v53 = vshrl.u32 %v52, 7
    %v54 = vsub.s32 0, %v53
    %v55 = vrot.slane %v45, %v54
    %v56 = vmul.f32 %v25, %v51
    %v57 = vmul.f32 %v25, %v55
    %v58 = vmul.f32 %v30, %v51
    %v59 = vmul.f32 %v30, %v55
    %v60 = vmul.f32 %v35, %v51
    %v61 = vmul.f32 %v35, %v55
    %63 = vset.pattern.permute.xlu0 0
    %64 = vperm.xlu0 %63, %v18
    %v65 = vpop.permute.xlu0 %64
    %68 = vset.pattern.permute.xlu0 0
    %69 = vperm.xlu0 %68, %v19
    %v70 = vpop.permute.xlu0 %69
    %73 = vset.pattern.permute.xlu0 0
    %74 = vperm.xlu0 %73, %v20
    %v75 = vpop.permute.xlu0 %74
    %v77 = vadd.f32 %v65, %v56
    %v78 = vadd.f32 %v65, %v57
    %v79 = vadd.f32 %v70, %v58
    %v80 = vadd.f32 %v70, %v59
    %v81 = vadd.f32 %v75, %v60
    %v82 = vadd.f32 %v75, %v61
    %83 = vset.pattern.permute.xlu0 1
    %84 = vperm.xlu0 %83, %v15
    %v85 = vpop.permute.xlu0 %84
    %87 = vset.pattern.permute.xlu0 1
    %88 = vperm.xlu0 %87, %v16
    %v89 = vpop.permute.xlu0 %88
    %91 = vset.pattern.permute.xlu0 1
    %92 = vperm.xlu0 %91, %v17
    %v93 = vpop.permute.xlu0 %92
    %v95 = vlaneseq
    %v96 = vshrl.u32 %v95, 7
    %v97 = vsub.s32 1, %v96
    %v98 = vrot.slane %v21, %v97
    %v99 = vlaneseq
    %v100 = vshrl.u32 %v99, 7
    %v101 = vsub.s32 5, %v100
    %v102 = vrot.slane %v21, %v101
    %v105 = vlaneseq
    %v106 = vshrl.u32 %v105, 7
    %v107 = vsub.s32 1, %v106
    %v108 = vrot.slane %v98, %v107
    %v109 = vlaneseq
    %v110 = vshrl.u32 %v109, 7
    %v111 = vsub.s32 1, %v110
    %v112 = vrot.slane %v102, %v111
    %v113 = vmul.f32 %v85, %v108
    %v114 = vmul.f32 %v85, %v112
    %v115 = vmul.f32 %v89, %v108
    %v116 = vmul.f32 %v89, %v112
    %v117 = vmul.f32 %v93, %v108
    %v118 = vmul.f32 %v93, %v112
    %v119 = vadd.f32 %v77, %v113
    %v120 = vadd.f32 %v78, %v114
    %v121 = vadd.f32 %v79, %v115
    %v122 = vadd.f32 %v80, %v116
    %v123 = vadd.f32 %v81, %v117
    %v124 = vadd.f32 %v82, %v118
    %125 = vset.pattern.permute.xlu0 2
    %126 = vperm.xlu0 %125, %v15
    %v127 = vpop.permute.xlu0 %126
    %129 = vset.pattern.permute.xlu0 2
    %130 = vperm.xlu0 %129, %v16
    %v131 = vpop.permute.xlu0 %130
    %133 = vset.pattern.permute.xlu0 2
    %134 = vperm.xlu0 %133, %v17
    %v135 = vpop.permute.xlu0 %134
    %v137 = vlaneseq
    %v138 = vshrl.u32 %v137, 7
    %v139 = vsub.s32 2, %v138
    %v140 = vrot.slane %v21, %v139
    %v141 = vlaneseq
    %v142 = vshrl.u32 %v141, 7
    %v143 = vsub.s32 6, %v142
    %v144 = vrot.slane %v21, %v143
    %v147 = vlaneseq
    %v148 = vshrl.u32 %v147, 7
    %v149 = vsub.s32 2, %v148
    %v150 = vrot.slane %v140, %v149
    %v151 = vlaneseq
    %v152 = vshrl.u32 %v151, 7
    %v153 = vsub.s32 2, %v152
    %v154 = vrot.slane %v144, %v153
    %v155 = vmul.f32 %v127, %v150
    %v156 = vmul.f32 %v127, %v154
    %v157 = vmul.f32 %v131, %v150
    %v158 = vmul.f32 %v131, %v154
    %v159 = vmul.f32 %v135, %v150
    %v160 = vmul.f32 %v135, %v154
    %v161 = vadd.f32 %v119, %v155
    %v162 = vadd.f32 %v120, %v156
    %v163 = vadd.f32 %v121, %v157
    %v164 = vadd.f32 %v122, %v158
    %v165 = vadd.f32 %v123, %v159
    %v166 = vadd.f32 %v124, %v160
    %167 = vset.pattern.permute.xlu0 3
    %168 = vperm.xlu0 %167, %v15
    %v169 = vpop.permute.xlu0 %168
    %171 = vset.pattern.permute.xlu0 3
    %172 = vperm.xlu0 %171, %v16
    %v173 = vpop.permute.xlu0 %172
    %175 = vset.pattern.permute.xlu0 3
    %176 = vperm.xlu0 %175, %v17
    %v177 = vpop.permute.xlu0 %176
    %v179 = vlaneseq
    %v180 = vshrl.u32 %v179, 7
    %v181 = vsub.s32 3, %v180
    %v182 = vrot.slane %v21, %v181
    %v183 = vlaneseq
    %v184 = vshrl.u32 %v183, 7
    %v185 = vsub.s32 7, %v184
    %v186 = vrot.slane %v21, %v185
    %v189 = vlaneseq
    %v190 = vshrl.u32 %v189, 7
    %v191 = vsub.s32 3, %v190
    %v192 = vrot.slane %v182, %v191
    %v193 = vlaneseq
    %v194 = vshrl.u32 %v193, 7
    %v195 = vsub.s32 3, %v194
    %v196 = vrot.slane %v186, %v195
    %v197 = vmul.f32 %v169, %v192
    %v198 = vmul.f32 %v169, %v196
    %v199 = vmul.f32 %v173, %v192
    %v200 = vmul.f32 %v173, %v196
    %v201 = vmul.f32 %v177, %v192
    %v202 = vmul.f32 %v177, %v196
    %v203 = vadd.f32 %v161, %v197
    %v204 = vadd.f32 %v162, %v198
    %v205 = vadd.f32 %v163, %v199
    %v206 = vadd.f32 %v164, %v200
    %v207 = vadd.f32 %v165, %v201
    %v208 = vadd.f32 %v166, %v202
    %209 = vst [vmem:[#allocation2] sm:$0xff] %v203
    %210 = vst [vmem:[#allocation2 + $0x8] sm:$0xff] %v204
    %211 = vst [vmem:[#allocation2 + $0x10] sm:$0xff] %v205
    %212 = vst [vmem:[#allocation2 + $0x18] sm:$0xff] %v206
    %213 = vst [vmem:[#allocation2 + $0x20] sm:$0xff] %v207
    %214 = vst [vmem:[#allocation2 + $0x28] sm:$0xff] %v208
    %s215 = scalar_lea.vmem %s0, 8
    %v216 = vld [vmem:[%s215] sm:$0xff]
    %v218 = vlaneseq
    %v219 = vshrl.u32 %v218, 7
    %v220 = vsub.s32 0, %v219
    %v221 = vrot.slane %v216, %v220
    %v222 = vlaneseq
    %v223 = vshrl.u32 %v222, 7
    %v224 = vsub.s32 4, %v223
    %v225 = vrot.slane %v216, %v224
    %v228 = vlaneseq
    %v229 = vshrl.u32 %v228, 7
    %v230 = vsub.s32 0, %v229
    %v231 = vrot.slane %v221, %v230
    %v232 = vlaneseq
    %v233 = vshrl.u32 %v232, 7
    %v234 = vsub.s32 0, %v233
    %v235 = vrot.slane %v225, %v234
    %v236 = vmul.f32 %v25, %v231
    %v237 = vmul.f32 %v25, %v235
    %v238 = vmul.f32 %v30, %v231
    %v239 = vmul.f32 %v30, %v235
    %v240 = vmul.f32 %v35, %v231
    %v241 = vmul.f32 %v35, %v235
    %v242 = vadd.f32 %v65, %v236
    %v243 = vadd.f32 %v65, %v237
    %v244 = vadd.f32 %v70, %v238
    %v245 = vadd.f32 %v70, %v239
    %v246 = vadd.f32 %v75, %v240
    %v247 = vadd.f32 %v75, %v241
    %v248 = vlaneseq
    %v249 = vshrl.u32 %v248, 7
    %v250 = vsub.s32 1, %v249
    %v251 = vrot.slane %v216, %v250
    %v252 = vlaneseq
    %v253 = vshrl.u32 %v252, 7
    %v254 = vsub.s32 5, %v253
    %v255 = vrot.slane %v216, %v254
    %v258 = vlaneseq
    %v259 = vshrl.u32 %v258, 7
    %v260 = vsub.s32 1, %v259
    %v261 = vrot.slane %v251, %v260
    %v262 = vlaneseq
    %v263 = vshrl.u32 %v262, 7
    %v264 = vsub.s32 1, %v263
    %v265 = vrot.slane %v255, %v264
    %v266 = vmul.f32 %v85, %v261
    %v267 = vmul.f32 %v85, %v265
    %v268 = vmul.f32 %v89, %v261
    %v269 = vmul.f32 %v89, %v265
    %v270 = vmul.f32 %v93, %v261
    %v271 = vmul.f32 %v93, %v265
    %v272 = vadd.f32 %v242, %v266
    %v273 = vadd.f32 %v243, %v267
    %v274 = vadd.f32 %v244, %v268
    %v275 = vadd.f32 %v245, %v269
    %v276 = vadd.f32 %v246, %v270
    %v277 = vadd.f32 %v247, %v271
    %v278 = vlaneseq
    %v279 = vshrl.u32 %v278, 7
    %v280 = vsub.s32 2, %v279
    %v281 = vrot.slane %v216, %v280
    %v282 = vlaneseq
    %v283 = vshrl.u32 %v282, 7
    %v284 = vsub.s32 6, %v283
    %v285 = vrot.slane %v216, %v284
    %v288 = vlaneseq
    %v289 = vshrl.u32 %v288, 7
    %v290 = vsub.s32 2, %v289
    %v291 = vrot.slane %v281, %v290
    %v292 = vlaneseq
    %v293 = vshrl.u32 %v292, 7
    %v294 = vsub.s32 2, %v293
    %v295 = vrot.slane %v285, %v294
    %v296 = vmul.f32 %v127, %v291
    %v297 = vmul.f32 %v127, %v295
    %v298 = vmul.f32 %v131, %v291
    %v299 = vmul.f32 %v131, %v295
    %v300 = vmul.f32 %v135, %v291
    %v301 = vmul.f32 %v135, %v295
    %v302 = vadd.f32 %v272, %v296
    %v303 = vadd.f32 %v273, %v297
    %v304 = vadd.f32 %v274, %v298
    %v305 = vadd.f32 %v275, %v299
    %v306 = vadd.f32 %v276, %v300
    %v307 = vadd.f32 %v277, %v301
    %v308 = vlaneseq
    %v309 = vshrl.u32 %v308, 7
    %v310 = vsub.s32 3, %v309
    %v311 = vrot.slane %v216, %v310
    %v312 = vlaneseq
    %v313 = vshrl.u32 %v312, 7
    %v314 = vsub.s32 7, %v313
    %v315 = vrot.slane %v216, %v314
    %v318 = vlaneseq
    %v319 = vshrl.u32 %v318, 7
    %v320 = vsub.s32 3, %v319
    %v321 = vrot.slane %v311, %v320
    %v322 = vlaneseq
    %v323 = vshrl.u32 %v322, 7
    %v324 = vsub.s32 3, %v323
    %v325 = vrot.slane %v315, %v324
    %v326 = vmul.f32 %v169, %v321
    %v327 = vmul.f32 %v169, %v325
    %v328 = vmul.f32 %v173, %v321
    %v329 = vmul.f32 %v173, %v325
    %v330 = vmul.f32 %v177, %v321
    %v331 = vmul.f32 %v177, %v325
    %v332 = vadd.f32 %v302, %v326
    %v333 = vadd.f32 %v303, %v327
    %v334 = vadd.f32 %v304, %v328
    %v335 = vadd.f32 %v305, %v329
    %v336 = vadd.f32 %v306, %v330
    %v337 = vadd.f32 %v307, %v331
    %s338 = scalar_lea.vmem [#allocation2], 48
    %339 = vst [vmem:[%s338] sm:$0xff] %v332
    %340 = vst [vmem:[%s338 + $0x8] sm:$0xff] %v333
    %341 = vst [vmem:[%s338 + $0x10] sm:$0xff] %v334
    %342 = vst [vmem:[%s338 + $0x18] sm:$0xff] %v335
    %343 = vst [vmem:[%s338 + $0x20] sm:$0xff] %v336
    %344 = vst [vmem:[%s338 + $0x28] sm:$0xff] %v337
    // Predicated region
    $region14: #{tpu_custom_call.1} parent=1 // pred_check
      _
    $region15: #{tpu_custom_call.1} parent=1 // pred_check_branch
      %346 = sbr.rel (0) target = $region17
    $region16: #{tpu_custom_call.1} parent=1 // pred_region
      %s348 = ssub.s32 1536, 1536
      %349 = vsyncadd [#allocation3], %s348
      %s350 = sshll.u32 [#allocation2], 4
      %s351 = int_to_ptr.vmem [resolvable:$true] %s350
      %356 = dma.vmem_to_hbm [thread:$0]  %s351, 1536, %s3, [#allocation3], 256, 256, 16
    $region17: #{tpu_custom_call.1} parent=1 // pred_fallthru
      _
    // Predicated region
    $region18: #{tpu_custom_call.1} parent=1 // pred_check
      _
    $region19: #{tpu_custom_call.1} parent=1 // pred_check_branch
      %358 = sbr.rel (0) target = $region21
    $region20: #{tpu_custom_call.1} parent=1 // pred_region
      %359 = dma.done [#allocation3], 1536
    $region21: #{tpu_custom_call.1} parent=1 // pred_fallthru
      _
    %360 = vsyncpa [#allocation3], 1

</llo_original>
